<compile_context>
chip_gen: v7x
topology: tpu7x:2x2x1
jax: 0.10.0
libtpu: 0.0.40
codegen_flags: <defaults>
</compile_context>

<pallas_src>
import functools
import math

import jax
import jax.numpy as jnp
from jax.experimental import pallas as pl
from jax.experimental.pallas import tpu as pltpu


def _sdp_flash_kernel(*args, scale_factor, dropout_p, has_dropout):
    if has_dropout:
        x1_ref, x2_ref, keep_ref, o_ref, m_sc, l_sc, acc_sc = args
    else:
        x1_ref, x2_ref, o_ref, m_sc, l_sc, acc_sc = args
        keep_ref = None

    k_step = pl.program_id(2)

    @pl.when(k_step == 0)
    def _init():
        m_sc[...] = jnp.full(m_sc.shape, -jnp.inf, dtype=m_sc.dtype)
        l_sc[...] = jnp.zeros(l_sc.shape, dtype=l_sc.dtype)
        acc_sc[...] = jnp.zeros(acc_sc.shape, dtype=acc_sc.dtype)

    # x1 tile (tq, D): fold scale here (tq*D work) instead of on (tq, tk).
    x1 = x1_ref[...]
    if scale_factor != 1.0:
        x1 = x1 * jnp.asarray(scale_factor, dtype=x1.dtype)
    x2 = x2_ref[...]                      # (tk, D) key/value tile

    # scores = (x1*scale) @ x2^T  — contract on D directly (no explicit
    # transpose), f32 accumulation on the MXU.
    s = jax.lax.dot_general(
        x1, x2,
        dimension_numbers=(((1,), (1,)), ((), ())),
        preferred_element_type=jnp.float32,
    )

    # Online-softmax update (f32 math; exp goes to the EUP slot).
    m_prev = m_sc[...]
    m_new = jnp.maximum(m_prev, jnp.max(s, axis=-1, keepdims=True))
    alpha = jnp.exp(m_prev - m_new)
    p = jnp.exp(s - m_new)
    l_sc[...] = alpha * l_sc[...] + jnp.sum(p, axis=-1, keepdims=True)

    # Dropout: mask only the numerator (the softmax denominator sums over all
    # keys regardless of the mask), so out = (keep * probs / (1-p)) @ x2.
    if has_dropout:
        p = p * keep_ref[...]

    acc_sc[...] = alpha * acc_sc[...] + jax.lax.dot_general(
        p.astype(x2.dtype), x2,
        dimension_numbers=(((1,), (0,)), ((), ())),
        preferred_element_type=jnp.float32,
    )
    m_sc[...] = m_new

    @pl.when(k_step == pl.num_programs(2) - 1)
    def _finalize():
        out_scale = pl.reciprocal(l_sc[...], approx=True)      # (tq, 1)
        if has_dropout:
            out_scale = out_scale * jnp.float32(1.0 / (1.0 - dropout_p))
        o_ref[...] = (acc_sc[...] * out_scale).astype(o_ref.dtype)


def model_forward(x1, x2, *, scale_factor=1.0, dropout_p=1.0,
                  dropout_key=None, tk_max=1024):
    """Pallas TPU implementation of Model.forward(x1, x2)."""
    B, S1, D = x1.shape
    B2, S2, D2 = x2.shape
    assert B == B2 and D == D2, "x1/x2 must share batch and feature dims"

    dropout_p = float(dropout_p)
    scale_factor = float(scale_factor)

    # F.dropout with p >= 1 (training=True) zeros everything: skip the kernel.
    if dropout_p >= 1.0:
        return jnp.zeros((B, S1, D), dtype=x1.dtype)

    has_dropout = 0.0 < dropout_p < 1.0

    # Tile sizes: tq bounds the per-step f32 intermediates; tk bounds the
    # key/value tile so VMEM stays flat for arbitrary S2 (v7x-friendly).
    tq = next((t for t in (128, 64, 32, 16, 8) if S1 % t == 0), S1)
    tk = next((t for t in (1024, 512, 256, 128)
               if t <= tk_max and S2 % t == 0), S2)
    n_q = S1 // tq
    n_k = S2 // tk

    kernel = functools.partial(
        _sdp_flash_kernel,
        scale_factor=scale_factor,
        dropout_p=dropout_p,
        has_dropout=has_dropout,
    )

    in_specs = [
        pl.BlockSpec((pl.Squeezed(), tq, D), lambda b, q, k: (b, q, 0)),
        pl.BlockSpec((pl.Squeezed(), tk, D), lambda b, q, k: (b, k, 0)),
    ]
    inputs = [x1, x2]

    if has_dropout:
        if dropout_key is None:
            dropout_key = jax.random.PRNGKey(0)
        keep = jax.random.bernoulli(
            dropout_key, 1.0 - dropout_p, (B, S1, S2)).astype(jnp.float32)
        in_specs.append(
            pl.BlockSpec((pl.Squeezed(), tq, tk), lambda b, q, k: (b, q, k)))
        inputs.append(keep)

    itemsize = jnp.dtype(x1.dtype).itemsize
    bytes_accessed = (x1.size + x2.size + B * S1 * D) * itemsize
    if has_dropout:
        bytes_accessed += B * S1 * S2 * 4
    cost = pl.CostEstimate(
        flops=4 * B * S1 * S2 * D,          # two matmuls, 2*M*N*K each
        transcendentals=B * S1 * S2,        # exp
        bytes_accessed=bytes_accessed,
    )

    return pl.pallas_call(
        kernel,
        out_shape=jax.ShapeDtypeStruct((B, S1, D), x1.dtype),
        grid=(B, n_q, n_k),
        in_specs=in_specs,
        out_specs=pl.BlockSpec((pl.Squeezed(), tq, D), lambda b, q, k: (b, q, 0)),
        scratch_shapes=[
            pltpu.VMEM((tq, 1), jnp.float32),   # running max
            pltpu.VMEM((tq, 1), jnp.float32),   # running denom
            pltpu.VMEM((tq, D), jnp.float32),   # output accumulator
        ],
        compiler_params=pltpu.CompilerParams(
            dimension_semantics=("parallel", "parallel", "arbitrary"),
        ),
        cost_estimate=cost,
    )(*inputs)


if __name__ == "__main__":
    # Module constructor args from the reference script.
    default_scale_factor = 1
    default_dropout_p = 1

    # Small, self-consistent shapes (the reference script's x1/x2 feature dims
    # were incompatible for matmul; use matching D).
    B, S1, S2, D = 2, 8, 8, 16
    key = jax.random.PRNGKey(0)
    k1, k2, k3, k4, k5 = jax.random.split(key, 5)
    x1 = jax.random.normal(k1, (B, S1, D), dtype=jnp.float32)
    x2 = jax.random.normal(k2, (B, S2, D), dtype=jnp.float32)

    # Case 1: module defaults (dropout_p=1) -> exact zeros (short-circuit).
    out_default = jax.block_until_ready(
        model_forward(x1, x2, scale_factor=default_scale_factor,
                      dropout_p=default_dropout_p))
    assert out_default.shape == (B, S1, D)
    assert bool(jnp.all(out_default == 0.0)), "dropout_p=1 must produce zeros"

    # Case 2: dropout disabled -> deterministic path, check vs pure-JAX ref.
    scale = 1.0 / math.sqrt(D)
    out = jax.block_until_ready(
        model_forward(x1, x2, scale_factor=scale, dropout_p=0.0))
    scores = jnp.einsum("bqd,bkd->bqk", x1, x2) * scale
    probs = jax.nn.softmax(scores, axis=-1)
    ref = jnp.einsum("bqk,bkd->bqd", probs, x2)
    assert out.shape == (B, S1, D)
    assert jnp.allclose(out, ref, atol=2e-3, rtol=2e-3), "mismatch vs reference"

    # Case 3: 0 < p < 1 — dropout mask comes from jax.random in the wrapper;
    # rebuild the same mask here and compare against a masked reference.
    p_drop = 0.5
    out_do = jax.block_until_ready(
        model_forward(x1, x2, scale_factor=scale, dropout_p=p_drop,
                      dropout_key=k3))
    keep = jax.random.bernoulli(k3, 1.0 - p_drop, (B, S1, S2)).astype(jnp.float32)
    ref_do = jnp.einsum("bqk,bkd->bqd", probs * keep / (1.0 - p_drop), x2)
    assert out_do.shape == (B, S1, D)
    assert jnp.allclose(out_do, ref_do, atol=2e-3, rtol=2e-3), "dropout mismatch"

    # Case 4: larger shapes exercising multi-tile online softmax
    # (n_q = 2, n_k = 2 via tk_max=128).
    B2_, S1_, S2_, D_ = 1, 256, 256, 32
    a = jax.random.normal(k4, (B2_, S1_, D_), dtype=jnp.float32)
    b = jax.random.normal(k5, (B2_, S2_, D_), dtype=jnp.float32)
    scale2 = 1.0 / math.sqrt(D_)
    out2 = jax.block_until_ready(
        model_forward(a, b, scale_factor=scale2, dropout_p=0.0, tk_max=128))
    scores2 = jnp.einsum("bqd,bkd->bqk", a, b) * scale2
    ref2 = jnp.einsum("bqk,bkd->bqd", jax.nn.softmax(scores2, -1), b)
    assert jnp.allclose(out2, ref2, atol=2e-3, rtol=2e-3), "flash-loop mismatch"

    print("KERNEL_OK")
</pallas_src>

<mosaic_0001>
module attributes {stable_mosaic.version = 11 : i64} {
  func.func @_sdp_flash_kernel(%arg0: i32, %arg1: i32, %arg2: i32, %arg3: memref<1x8x16xf32, #tpu.memory_space<vmem>>, %arg4: memref<1x8x16xf32, #tpu.memory_space<vmem>>, %arg5: memref<1x8x16xf32, #tpu.memory_space<vmem>>, %arg6: memref<8x1xf32, #tpu.memory_space<vmem>>, %arg7: memref<8x1xf32, #tpu.memory_space<vmem>>, %arg8: memref<8x16xf32, #tpu.memory_space<vmem>>) attributes {dimension_semantics = [#tpu.dimension_semantics<parallel>, #tpu.dimension_semantics<parallel>, #tpu.dimension_semantics<arbitrary>], iteration_bounds = array<i64: 2, 1, 1>, scalar_prefetch = 0 : i64, scratch_operands = 3 : i64, tpu.core_type = #tpu.core_type<tc>, window_params = [{transform_indices = @transform_0, window_bounds = array<i64: 1, 8, 16>}, {transform_indices = @transform_1, window_bounds = array<i64: 1, 8, 16>}, {transform_indices = @transform_2, window_bounds = array<i64: 1, 8, 16>}]} {
    %c0_i32 = arith.constant 0 : i32
    %0 = arith.cmpi eq, %arg2, %c0_i32 : i32
    %1 = arith.extui %0 : i1 to i32
    %c0_i32_0 = arith.constant 0 : i32
    %2 = arith.cmpi ne, %1, %c0_i32_0 : i32
    scf.if %2 {
      %cst_24 = arith.constant 0xFF800000 : f32
      %35 = vector.broadcast %cst_24 : f32 to vector<8x1xf32>
      %c0_25 = arith.constant 0 : index
      %c0_26 = arith.constant 0 : index
      %36 = vector.load %arg6[%c0_25, %c0_26] : memref<8x1xf32, #tpu.memory_space<vmem>>, vector<8x1xf32>
      tpu.vector_store %arg6[%c0_25, %c0_26], %35 {strides = array<i32>} : memref<8x1xf32, #tpu.memory_space<vmem>>, vector<8x1xf32>,
      %cst_27 = arith.constant 0.000000e+00 : f32
      %37 = vector.broadcast %cst_27 : f32 to vector<8x1xf32>
      %c0_28 = arith.constant 0 : index
      %c0_29 = arith.constant 0 : index
      %38 = vector.load %arg7[%c0_28, %c0_29] : memref<8x1xf32, #tpu.memory_space<vmem>>, vector<8x1xf32>
      tpu.vector_store %arg7[%c0_28, %c0_29], %37 {strides = array<i32>} : memref<8x1xf32, #tpu.memory_space<vmem>>, vector<8x1xf32>,
      %cst_30 = arith.constant 0.000000e+00 : f32
      %39 = vector.broadcast %cst_30 : f32 to vector<8x16xf32>
      %c0_31 = arith.constant 0 : index
      %c0_32 = arith.constant 0 : index
      %40 = vector.load %arg8[%c0_31, %c0_32] : memref<8x16xf32, #tpu.memory_space<vmem>>, vector<8x16xf32>
      tpu.vector_store %arg8[%c0_31, %c0_32], %39 {strides = array<i32>} : memref<8x16xf32, #tpu.memory_space<vmem>>, vector<8x16xf32>,
    } else {
    }
    %c0 = arith.constant 0 : index
    %c0_1 = arith.constant 0 : index
    %c0_2 = arith.constant 0 : index
    %3 = vector.load %arg3[%c0, %c0_1, %c0_2] : memref<1x8x16xf32, #tpu.memory_space<vmem>>, vector<1x8x16xf32>
    %4 = vector.shape_cast %3 : vector<1x8x16xf32> to vector<8x16xf32>
    %cst = arith.constant 2.500000e-01 : f32
    %5 = vector.broadcast %cst : f32 to vector<8x16xf32>
    %6 = arith.mulf %4, %5 : vector<8x16xf32>
    %c0_3 = arith.constant 0 : index
    %c0_4 = arith.constant 0 : index
    %c0_5 = arith.constant 0 : index
    %7 = vector.load %arg4[%c0_3, %c0_4, %c0_5] : memref<1x8x16xf32, #tpu.memory_space<vmem>>, vector<1x8x16xf32>
    %8 = vector.shape_cast %7 : vector<1x8x16xf32> to vector<8x16xf32>
    %cst_6 = arith.constant dense<0.000000e+00> : vector<8x8xf32>
    %9 = tpu.matmul %6, %8, %cst_6 {dimension_numbers = #tpu.dot_dimension_numbers<[1], [1], [0], [0], [0, 0, 1, 0], [], []>} : vector<8x16xf32>, vector<8x16xf32>, vector<8x8xf32> -> vector<8x8xf32>
    %c0_7 = arith.constant 0 : index
    %c0_8 = arith.constant 0 : index
    %10 = vector.load %arg6[%c0_7, %c0_8] : memref<8x1xf32, #tpu.memory_space<vmem>>, vector<8x1xf32>
    %cst_9 = arith.constant dense<0xFF800000> : vector<8xf32>
    %11 = vector.multi_reduction <maximumf>, %9, %cst_9 [1] : vector<8x8xf32> to vector<8xf32>
    %12 = vector.shape_cast %11 : vector<8xf32> to vector<8x1xf32>
    %13 = arith.maximumf %10, %12 : vector<8x1xf32>
    %14 = arith.subf %10, %13 : vector<8x1xf32>
    %15 = math.exp %14 : vector<8x1xf32>
    %16 = vector.broadcast %13 : vector<8x1xf32> to vector<8x8xf32>
    %17 = arith.subf %9, %16 : vector<8x8xf32>
    %18 = math.exp %17 : vector<8x8xf32>
    %c0_10 = arith.constant 0 : index
    %c0_11 = arith.constant 0 : index
    %19 = vector.load %arg7[%c0_10, %c0_11] : memref<8x1xf32, #tpu.memory_space<vmem>>, vector<8x1xf32>
    %20 = arith.mulf %15, %19 : vector<8x1xf32>
    %cst_12 = arith.constant dense<0.000000e+00> : vector<8xf32>
    %21 = vector.multi_reduction <add>, %18, %cst_12 [1] : vector<8x8xf32> to vector<8xf32>
    %22 = vector.shape_cast %21 : vector<8xf32> to vector<8x1xf32>
    %23 = arith.addf %20, %22 : vector<8x1xf32>
    %c0_13 = arith.constant 0 : index
    %c0_14 = arith.constant 0 : index
    %24 = vector.load %arg7[%c0_13, %c0_14] : memref<8x1xf32, #tpu.memory_space<vmem>>, vector<8x1xf32>
    tpu.vector_store %arg7[%c0_13, %c0_14], %23 {strides = array<i32>} : memref<8x1xf32, #tpu.memory_space<vmem>>, vector<8x1xf32>,
    %c0_15 = arith.constant 0 : index
    %c0_16 = arith.constant 0 : index
    %25 = vector.load %arg8[%c0_15, %c0_16] : memref<8x16xf32, #tpu.memory_space<vmem>>, vector<8x16xf32>
    %26 = vector.broadcast %15 : vector<8x1xf32> to vector<8x16xf32>
    %27 = arith.mulf %26, %25 : vector<8x16xf32>
    %cst_17 = arith.constant dense<0.000000e+00> : vector<8x16xf32>
    %28 = tpu.matmul %18, %8, %cst_17 {dimension_numbers = #tpu.dot_dimension_numbers<[1], [0], [0], [1], [0, 0, 1, 1], [], []>} : vector<8x8xf32>, vector<8x16xf32>, vector<8x16xf32> -> vector<8x16xf32>
    %29 = arith.addf %27, %28 : vector<8x16xf32>
    %c0_18 = arith.constant 0 : index
    %c0_19 = arith.constant 0 : index
    %30 = vector.load %arg8[%c0_18, %c0_19] : memref<8x16xf32, #tpu.memory_space<vmem>>, vector<8x16xf32>
    tpu.vector_store %arg8[%c0_18, %c0_19], %29 {strides = array<i32>} : memref<8x16xf32, #tpu.memory_space<vmem>>, vector<8x16xf32>,
    %c0_20 = arith.constant 0 : index
    %c0_21 = arith.constant 0 : index
    %31 = vector.load %arg6[%c0_20, %c0_21] : memref<8x1xf32, #tpu.memory_space<vmem>>, vector<8x1xf32>
    tpu.vector_store %arg6[%c0_20, %c0_21], %13 {strides = array<i32>} : memref<8x1xf32, #tpu.memory_space<vmem>>, vector<8x1xf32>,
    %c0_i32_22 = arith.constant 0 : i32
    %32 = arith.cmpi eq, %arg2, %c0_i32_22 : i32
    %33 = arith.extui %32 : i1 to i32
    %c0_i32_23 = arith.constant 0 : i32
    %34 = arith.cmpi ne, %33, %c0_i32_23 : i32
    scf.if %34 {
      %c0_24 = arith.constant 0 : index
      %c0_25 = arith.constant 0 : index
      %35 = vector.load %arg7[%c0_24, %c0_25] : memref<8x1xf32, #tpu.memory_space<vmem>>, vector<8x1xf32>
      %36 = tpu.reciprocal %35 {approx = true} : vector<8x1xf32> -> vector<8x1xf32>
      %c0_26 = arith.constant 0 : index
      %c0_27 = arith.constant 0 : index
      %37 = vector.load %arg8[%c0_26, %c0_27] : memref<8x16xf32, #tpu.memory_space<vmem>>, vector<8x16xf32>
      %38 = vector.broadcast %36 : vector<8x1xf32> to vector<8x16xf32>
      %39 = arith.mulf %37, %38 : vector<8x16xf32>
      %c0_28 = arith.constant 0 : index
      %c0_29 = arith.constant 0 : index
      %c0_30 = arith.constant 0 : index
      %40 = vector.load %arg5[%c0_28, %c0_29, %c0_30] : memref<1x8x16xf32, #tpu.memory_space<vmem>>, vector<1x8x16xf32>
      %41 = vector.shape_cast %40 : vector<1x8x16xf32> to vector<8x16xf32>
      %42 = vector.shape_cast %39 : vector<8x16xf32> to vector<1x8x16xf32>
      tpu.vector_store %arg5[%c0_28, %c0_29, %c0_30], %42 {strides = array<i32>} : memref<1x8x16xf32, #tpu.memory_space<vmem>>, vector<1x8x16xf32>,
    } else {
    }
    return
  }
  func.func @transform_0(%arg0: i32, %arg1: i32, %arg2: i32) -> (i32, i32, i32) {
    %c0_i32 = arith.constant 0 : i32
    %c0_i32_0 = arith.constant 0 : i32
    return %arg0, %arg1, %c0_i32 : i32, i32, i32
  }
  func.func @transform_1(%arg0: i32, %arg1: i32, %arg2: i32) -> (i32, i32, i32) {
    %c0_i32 = arith.constant 0 : i32
    %c0_i32_0 = arith.constant 0 : i32
    return %arg0, %arg2, %c0_i32 : i32, i32, i32
  }
  func.func @transform_2(%arg0: i32, %arg1: i32, %arg2: i32) -> (i32, i32, i32) {
    %c0_i32 = arith.constant 0 : i32
    %c0_i32_0 = arith.constant 0 : i32
    return %arg0, %arg1, %c0_i32 : i32, i32, i32
  }
}

</mosaic_0001>

<llo_original>
// kernel: tpu_custom_call.1
$region0: #{tpu_custom_call.1}
  #allocation0 [shape = 'u32[]', space=smem, size = 0x4, offset = 0x4, fixed_abs, tag = 'smem constant byte address 0x4 - core index']
  #allocation1 [shape = 'u32[144,128]{1,0:T(1,128)}', space=vmem, size = 0x12000, scoped, tag = 'internal scratch']
  #allocation2 [shape = 'f32[8,1]{1,0:T(8,128)}', space=vmem, size = 0x1000, scoped, tag = 'scratch operand']
  #allocation3 [shape = 'f32[8,1]{1,0:T(8,128)}', space=vmem, size = 0x1000, scoped, tag = 'scratch operand']
  #allocation4 [shape = 'f32[8,16]{1,0:T(8,128)}', space=vmem, size = 0x1000, scoped, tag = 'scratch operand']
  %s0 = inlined_call_operand.hbm [shape: f32[2,8,16], index: 0, kind: input, shape index: {}]
  %s1 = inlined_call_operand.hbm [shape: f32[2,8,16], index: 1, kind: input, shape index: {}]
  %s2 = inlined_call_operand.hbm [shape: f32[2,8,16], index: 2, kind: output, shape index: {}]
  %s3 = sld [smem:[#allocation0]]
  $region57: #{tpu_custom_call.1} parent=0
    _
  %s5 = ssub.s32 1, %s3
  %s6 = scalar_select 0, %s5, %s3
  $region1: #{tpu_custom_call.1} parent=0
    #allocation5 [shape = 'u8[8192]{0}', space=vmem, size = 0x2000, scoped, tag = 'input window, operand 0']
    #allocation6 [shape = 's32[2]{0}', space=sflag, size = 0x8, scoped, tag = 'scoped memory for tpu_custom_call.1']
    #allocation7 [shape = 's32[2]{0}', space=sflag, size = 0x8, scoped, tag = 'scoped memory for tpu_custom_call.1']
    #allocation8 [shape = 'u8[8192]{0}', space=vmem, size = 0x2000, scoped, tag = 'input window, operand 1']
    #allocation9 [shape = 's32[2]{0}', space=sflag, size = 0x8, scoped, tag = 'scoped memory for tpu_custom_call.1']
    #allocation10 [shape = 'u8[8192]{0}', space=vmem, size = 0x2000, scoped, tag = 'output window, operand 0']
    %7 = vsyncpa [#allocation6], 0
    %s8 = scalar_lea.sflag [#allocation6], 1
    %9 = vsyncpa %s8, 0
    %10 = vsyncpa [#allocation9], 0
    %s11 = scalar_lea.sflag [#allocation9], 1
    %12 = vsyncpa %s11, 0
    %13 = vsyncpa [#allocation7], 0
    %s14 = scalar_lea.sflag [#allocation7], 1
    %15 = vsyncpa %s14, 0
    loop: start=0, step=1, limit=4
    $region2: #{tpu_custom_call.1} parent=1 // loop_pre_header
      _
    $region3: #{tpu_custom_call.1} parent=1 // loop_header
      %s17 = sphi 0, %s21
      %p18 = scmp.ge.s32.totalorder %s17, 4
      %s24 = sphi 0, %s43
      %s25 = sphi 0, %s39
      %s26 = sphi 0, %s35
      %s27 = sphi 0, %s24
      %s28 = sphi 0, %s25
      %s29 = sphi 0, %s26
      %s30 = sphi 0, %s27
      %s31 = sphi 0, %s28
      %s32 = sphi 0, %s29
      %s48 = sphi 0, %s50
      %s51 = sphi 0, %s48
      %s52 = sphi 0, %s51
      %s68 = sphi 0, %s52
      %s76 = sphi 0, %s78
      %s79 = sphi 0, %s76
      %s80 = sphi 0, %s79
      %s96 = sphi 0, %s80
      %s104 = sphi 0, %s106
      %s107 = sphi 0, %s104
      %s108 = sphi 0, %s107
      %s124 = sphi 0, %s108
    $region4: #{tpu_custom_call.1} parent=1 // loop_header_branch
      %20 = sbr.rel (%p18) target = $region8
    $region5: #{tpu_custom_call.1} parent=1 // loop_body
      %s22 = ssub.s32 %s17, 1
      %s23 = ssub.s32 %s17, 2
      %s33 = sadd.s32 1, %s26
      %p34 = scmp.ge.s32.totalorder %s33, 1
      %s35 = scalar_select %p34, 0, %s33
      %s36 = sadd.s32 1, %s25
      %s37 = scalar_select %p34, %s36, %s25
      %p38 = scmp.ge.s32.totalorder %s37, 1
      %s39 = scalar_select %p38, 0, %s37
      %s40 = sadd.s32 1, %s24
      %s41 = scalar_select %p38, %s40, %s24
      %p42 = scmp.ge.s32.totalorder %s41, 2
      %s43 = scalar_select %p42, 0, %s41
      %s44 = ssub.s32 %s24, %s43
      %s45 = ssub.s32 %s25, %s39
      %s46 = sor.u32 %s44, %s45
      %p47 = scmp.eq.s32.totalorder %s46, 0
      %s49 = sadd.s32 %s48, 1
      %s50 = scalar_select %p47, %s48, %s49
      %p53 = pneg %p47
      %p54 = scmp.eq.s32.totalorder %s17, 1
      %p55 = por %p53, %p54
      %p56 = scmp.ne.s32.totalorder %s48, %s51
      %p57 = scmp.eq.s32.totalorder %s17, 0
      %p58 = por %p56, %p57
      %p59 = scmp.ne.s32.totalorder %s48, %s51
      %p60 = scmp.eq.s32.totalorder %s22, 1
      %p61 = por %p59, %p60
      %p62 = scmp.ne.s32.totalorder %s51, %s52
      %p63 = scmp.eq.s32.totalorder %s22, 0
      %p64 = por %p62, %p63
      %p65 = scmp.ne.s32.totalorder %s51, %s52
      %p66 = scmp.eq.s32.totalorder %s23, 1
      %p67 = por %p65, %p66
      %p69 = scmp.ne.s32.totalorder %s52, %s68
      %p70 = scmp.eq.s32.totalorder %s23, 0
      %p71 = por %p69, %p70
      %s72 = ssub.s32 %s24, %s43
      %s73 = ssub.s32 %s26, %s35
      %s74 = sor.u32 %s72, %s73
      %p75 = scmp.eq.s32.totalorder %s74, 0
      %s77 = sadd.s32 %s76, 1
      %s78 = scalar_select %p75, %s76, %s77
      %p81 = pneg %p75
      %p82 = scmp.eq.s32.totalorder %s17, 1
      %p83 = por %p81, %p82
      %p84 = scmp.ne.s32.totalorder %s76, %s79
      %p85 = scmp.eq.s32.totalorder %s17, 0
      %p86 = por %p84, %p85
      %p87 = scmp.ne.s32.totalorder %s76, %s79
      %p88 = scmp.eq.s32.totalorder %s22, 1
      %p89 = por %p87, %p88
      %p90 = scmp.ne.s32.totalorder %s79, %s80
      %p91 = scmp.eq.s32.totalorder %s22, 0
      %p92 = por %p90, %p91
      %p93 = scmp.ne.s32.totalorder %s79, %s80
      %p94 = scmp.eq.s32.totalorder %s23, 1
      %p95 = por %p93, %p94
      %p97 = scmp.ne.s32.totalorder %s80, %s96
      %p98 = scmp.eq.s32.totalorder %s23, 0
      %p99 = por %p97, %p98
      %s100 = ssub.s32 %s24, %s43
      %s101 = ssub.s32 %s25, %s39
      %s102 = sor.u32 %s100, %s101
      %p103 = scmp.eq.s32.totalorder %s102, 0
      %s105 = sadd.s32 %s104, 1
      %s106 = scalar_select %p103, %s104, %s105
      %p109 = pneg %p103
      %p110 = scmp.eq.s32.totalorder %s17, 1
      %p111 = por %p109, %p110
      %p112 = scmp.ne.s32.totalorder %s104, %s107
      %p113 = scmp.eq.s32.totalorder %s17, 0
      %p114 = por %p112, %p113
      %p115 = scmp.ne.s32.totalorder %s104, %s107
      %p116 = scmp.eq.s32.totalorder %s22, 1
      %p117 = por %p115, %p116
      %p118 = scmp.ne.s32.totalorder %s107, %s108
      %p119 = scmp.eq.s32.totalorder %s22, 0
      %p120 = por %p118, %p119
      %p121 = scmp.ne.s32.totalorder %s107, %s108
      %p122 = scmp.eq.s32.totalorder %s23, 1
      %p123 = por %p121, %p122
      %p125 = scmp.ne.s32.totalorder %s108, %s124
      %p126 = scmp.eq.s32.totalorder %s23, 0
      %p127 = por %p125, %p126
      %p128 = scmp.le.s32.totalorder 1, %s17
      %p129 = scmp.lt.s32.totalorder %s17, 3
      %p130 = pnand %p128, %p129
      %p131 = pneg %p130
      // Predicated region
      $region9: #{tpu_custom_call.1} parent=5 // pred_check
        _
      $region10: #{tpu_custom_call.1} parent=5 // pred_check_branch
        %133 = sbr.rel (%p130) target = $region12
      $region11: #{tpu_custom_call.1} parent=5 // pred_region
        %s134 = ssub.s32 %s17, 1
      $region12: #{tpu_custom_call.1} parent=5 // pred_fallthru
        _
      %p135 = scmp.lt.s32.totalorder %s17, 2
      // Predicated region
      $region13: #{tpu_custom_call.1} parent=5 // pred_check
        %p136 = pneg %p135
      $region14: #{tpu_custom_call.1} parent=5 // pred_check_branch
        %138 = sbr.rel (%p136) target = $region16
      $region15: #{tpu_custom_call.1} parent=5 // pred_region
        // Predicated region
        $region17: #{tpu_custom_call.1} parent=15 // pred_check
          %p139 = pneg %p58
        $region18: #{tpu_custom_call.1} parent=15 // pred_check_branch
          %141 = sbr.rel (%p139) target = $region20
        $region19: #{tpu_custom_call.1} parent=15 // pred_region
          %s142 = sand.u32 %s48, 1
          %s143 = scalar_lea.sflag [#allocation6], %s142
          %s144 = sand.u32 %s48, 1
          %s145 = smul.addr %s144, 8
          %s146 = scalar_lea.vmem [#allocation5], %s145
          %s148 = ssub.s32 128, 128
          %149 = vsyncadd %s143, %s148
          %s150 = sadd.s32 %s25, %s24
          %s151 = smul.addr %s150, 128
          %s152 = scalar_lea.hbm %s0, %s151
          %s154 = sshll.u32 %s146, 4
          %s155 = int_to_ptr.vmem [resolvable:$true] %s154
          %157 = dma.hbm_to_vmem [thread:$0]  %s152, 128, %s155, %s143
        $region20: #{tpu_custom_call.1} parent=15 // pred_fallthru
          _
        // Predicated region
        $region21: #{tpu_custom_call.1} parent=15 // pred_check
          %p158 = pneg %p86
        $region22: #{tpu_custom_call.1} parent=15 // pred_check_branch
          %160 = sbr.rel (%p158) target = $region24
        $region23: #{tpu_custom_call.1} parent=15 // pred_region
          %s161 = sand.u32 %s76, 1
          %s162 = scalar_lea.sflag [#allocation9], %s161
          %s163 = sand.u32 %s76, 1
          %s164 = smul.addr %s163, 8
          %s165 = scalar_lea.vmem [#allocation8], %s164
          %s167 = ssub.s32 128, 128
          %168 = vsyncadd %s162, %s167
          %s169 = sadd.s32 %s26, %s24
          %s170 = smul.addr %s169, 128
          %s171 = scalar_lea.hbm %s1, %s170
          %s173 = sshll.u32 %s165, 4
          %s174 = int_to_ptr.vmem [resolvable:$true] %s173
          %176 = dma.hbm_to_vmem [thread:$0]  %s171, 128, %s174, %s162
        $region24: #{tpu_custom_call.1} parent=15 // pred_fallthru
          _
      $region16: #{tpu_custom_call.1} parent=5 // pred_fallthru
        _
      %p177 = scmp.le.s32.totalorder 1, %s17
      %p178 = scmp.lt.s32.totalorder %s17, 3
      %p179 = pnand %p177, %p178
      %p180 = pneg %p179
      // Predicated region
      $region25: #{tpu_custom_call.1} parent=5 // pred_check
        _
      $region26: #{tpu_custom_call.1} parent=5 // pred_check_branch
        %182 = sbr.rel (%p179) target = $region28
      $region27: #{tpu_custom_call.1} parent=5 // pred_region
        %s183 = ssub.s32 %s17, 1
        %s184 = sand.u32 %s51, 1
        %s185 = scalar_lea.sflag [#allocation6], %s184
        %s186 = sand.u32 %s51, 1
        %s187 = smul.addr %s186, 8
        %s188 = scalar_lea.vmem [#allocation5], %s187
        // Predicated region
        $region29: #{tpu_custom_call.1} parent=27 // pred_check
          %p189 = pneg %p64
        $region30: #{tpu_custom_call.1} parent=27 // pred_check_branch
          %191 = sbr.rel (%p189) target = $region32
        $region31: #{tpu_custom_call.1} parent=27 // pred_region
          %192 = dma.done %s185, 128
        $region32: #{tpu_custom_call.1} parent=27 // pred_fallthru
          _
        %s193 = sand.u32 %s79, 1
        %s194 = scalar_lea.sflag [#allocation9], %s193
        %s195 = sand.u32 %s79, 1
        %s196 = smul.addr %s195, 8
        %s197 = scalar_lea.vmem [#allocation8], %s196
        // Predicated region
        $region33: #{tpu_custom_call.1} parent=27 // pred_check
          %p198 = pneg %p92
        $region34: #{tpu_custom_call.1} parent=27 // pred_check_branch
          %200 = sbr.rel (%p198) target = $region36
        $region35: #{tpu_custom_call.1} parent=27 // pred_region
          %201 = dma.done %s194, 128
        $region36: #{tpu_custom_call.1} parent=27 // pred_fallthru
          _
        %s202 = sand.u32 %s51, 1
        %s203 = scalar_lea.sflag [#allocation6], %s202
        %s204 = sand.u32 %s51, 1
        %s205 = smul.addr %s204, 8
        %s206 = scalar_lea.vmem [#allocation5], %s205
        %p207 = pneg %p64
        %p208 = pneg %p61
        %s209 = sand.u32 %s79, 1
        %s210 = scalar_lea.sflag [#allocation9], %s209
        %s211 = sand.u32 %s79, 1
        %s212 = smul.addr %s211, 8
        %s213 = scalar_lea.vmem [#allocation8], %s212
        %p214 = pneg %p92
        %p215 = pneg %p89
        %p216 = pneg %p120
        %p217 = pneg %p117
        %s218 = sand.u32 %s107, 1
        %s219 = scalar_lea.sflag [#allocation7], %s218
        %s220 = sand.u32 %s107, 1
        %s221 = smul.addr %s220, 8
        %s222 = scalar_lea.vmem [#allocation10], %s221
        %p223 = scmp.eq.s32.totalorder %s29, 0
        // Predicated region
        $region37: #{tpu_custom_call.1} parent=27 // pred_check
          %p224 = pneg %p223
        $region38: #{tpu_custom_call.1} parent=27 // pred_check_branch
          %226 = sbr.rel (%p224) target = $region40
        $region39: #{tpu_custom_call.1} parent=27 // pred_region
          %vm227 = vcmask 7168
          %228 = vst.msk [vmem:[#allocation2] sm:$0xff] %vm227, -inf
          %229 = vst.msk [vmem:[#allocation3] sm:$0xff] %vm227, 0.0
          %vm230 = vcmask 130048
          %231 = vst.msk [vmem:[#allocation4] sm:$0xff] %vm230, 0.0
        $region40: #{tpu_custom_call.1} parent=27 // pred_fallthru
          _
        %v232 = vld [vmem:[%s188] sm:$0xff]
        %v233 = vmul.f32 %v232, 0.25
        %v234 = vld [vmem:[%s197] sm:$0xff]
        %vm235 = vcmask 130048
        %v237 = vsel %vm235, %v233, 0
        %v240 = vsel %vm235, %v234, 0
        %242 = vmatprep.subr.mxu0 0.0
        %243 = vmatpush1.xpose.msra.mxu0 %v240
        %244 = vmatprep.subr.mxu0 0.0
        %245 = vmatpush1.xpose.msra.mxu0 0.0
        %246 = vmatprep.subr.mxu0 0.0
        %247 = vmatpush1.xpose.msra.mxu0 0.0
        %248 = vmatprep.subr.mxu0 0.0
        %249 = vmatpush1.xpose.msra.mxu0 0.0
        %250 = vmatprep.subr.mxu0 0.0
        %251 = vmatpush1.xpose.msra.mxu0 0.0
        %252 = vmatprep.subr.mxu0 0.0
        %253 = vmatpush1.xpose.msra.mxu0 0.0
        %254 = vmatprep.subr.mxu0 0.0
        %255 = vmatpush1.xpose.msra.mxu0 0.0
        %256 = vmatprep.subr.mxu0 0.0
        %257 = vmatpush1.xpose.msra.mxu0 0.0
        %258 = vmatprep.subr.mxu0 0.0
        %259 = vmatpush1.xpose.msra.mxu0 0.0
        %260 = vmatprep.subr.mxu0 0.0
        %261 = vmatpush1.xpose.msra.mxu0 0.0
        %262 = vmatprep.subr.mxu0 0.0
        %263 = vmatpush1.xpose.msra.mxu0 0.0
        %264 = vmatprep.subr.mxu0 0.0
        %265 = vmatpush1.xpose.msra.mxu0 0.0
        %266 = vmatprep.subr.mxu0 0.0
        %267 = vmatpush1.xpose.msra.mxu0 0.0
        %268 = vmatprep.subr.mxu0 0.0
        %269 = vmatpush1.xpose.msra.mxu0 0.0
        %270 = vmatprep.subr.mxu0 0.0
        %271 = vmatpush1.xpose.msra.mxu0 0.0
        %272 = vmatprep.subr.mxu0 0.0
        %273 = vmatpush1.xpose.msra.mxu0 0.0
        %274 = vmatprep.subr.mxu0 0.0
        %275 = vmatpush1.xpose.msra.mxu0 0.0
        %276 = vmatprep.subr.mxu0 0.0
        %277 = vmatpush1.xpose.msra.mxu0 0.0
        %278 = vmatprep.subr.mxu0 0.0
        %279 = vmatpush1.xpose.msra.mxu0 0.0
        %280 = vmatprep.subr.mxu0 0.0
        %281 = vmatpush1.xpose.msra.mxu0 0.0
        %282 = vmatprep.subr.mxu0 0.0
        %283 = vmatpush1.xpose.msra.mxu0 0.0
        %284 = vmatprep.subr.mxu0 0.0
        %285 = vmatpush1.xpose.msra.mxu0 0.0
        %286 = vmatprep.subr.mxu0 0.0
        %287 = vmatpush1.xpose.msra.mxu0 0.0
        %288 = vmatprep.subr.mxu0 0.0
        %289 = vmatpush1.xpose.msra.mxu0 0.0
        %290 = vmatprep.subr.mxu0 0.0
        %291 = vmatpush1.xpose.msra.mxu0 0.0
        %292 = vmatprep.subr.mxu0 0.0
        %293 = vmatpush1.xpose.msra.mxu0 0.0
        %294 = vmatprep.subr.mxu0 0.0
        %295 = vmatpush1.xpose.msra.mxu0 0.0
        %296 = vmatprep.subr.mxu0 0.0
        %297 = vmatpush1.xpose.msra.mxu0 0.0
        %298 = vmatprep.subr.mxu0 0.0
        %299 = vmatpush1.xpose.msra.mxu0 0.0
        %300 = vmatprep.subr.mxu0 0.0
        %301 = vmatpush1.xpose.msra.mxu0 0.0
        %302 = vmatprep.subr.mxu0 0.0
        %303 = vmatpush1.xpose.msra.mxu0 0.0
        %304 = vmatprep.subr.mxu0 0.0
        %305 = vmatpush1.xpose.msra.mxu0 0.0
        %306 = vmatprep.mubr.f32.mxu0 0.0
        %307 = vmatmul.mubr.f32.gmra.mrb[0].mxu0 %v237
        %v308 = vpop.f32.mrb[0].mxu0
        %v309 = vadd.f32 0.0, %v308
        %v310 = vpop.f32.mrb[0].mxu0
        %311 = vdwg.mxu0
        %v312 = vld [vmem:[#allocation2] sm:$0xff]
        %vm313 = vcmask 64512
        %v314 = vsel %vm313, %v309, -inf
        %315 = vmax.xlane.f32.xlu0 %v314
        %v316 = vpop.xlane.xlu0 %315
        %v317 = vmax.f32 %v312, %v316
        %v318 = vsub.f32 %v312, %v317
        %v319 = vmul.f32 %v318, 1.442695
        %v320 = vpow.pop %v319
        %322 = vset.pattern.permute.xlu0 0
        %323 = vperm.xlu0 %322, %v317
        %v324 = vpop.permute.xlu0 %323
        %v326 = vsub.f32 %v309, %v324
        %v327 = vmul.f32 %v326, 1.442695
        %v328 = vpow.pop %v327
        %v329 = vld [vmem:[#allocation3] sm:$0xff]
        %v330 = vmul.f32 %v320, %v329
        %v331 = vsel %vm313, %v328, 0.0
        %332 = vadd.xlane.f32.xlu0 %v331
        %v333 = vpop.xlane.xlu0 %332
        %v334 = vadd.f32 %v330, %v333
        %vm335 = vcmask 7168
        %336 = vst.msk [vmem:[#allocation3] sm:$0xff] %vm335, %v334
        %v337 = vld [vmem:[#allocation4] sm:$0xff]
        %339 = vset.pattern.permute.xlu0 0
        %340 = vperm.xlu0 %339, %v320
        %v341 = vpop.permute.xlu0 %340
        %v343 = vmul.f32 %v341, %v337
        %v345 = vsel %vm313, %v328, 0
        %347 = vmatprep.subr.mxu0 0.0
        %348 = vmatpush1.msra.mxu0 %v234
        %349 = vmatprep.subr.mxu0 0.0
        %350 = vmatpush1.msra.mxu0 0.0
        %351 = vmatprep.subr.mxu0 0.0
        %352 = vmatpush1.msra.mxu0 0.0
        %353 = vmatprep.subr.mxu0 0.0
        %354 = vmatpush1.msra.mxu0 0.0
        %355 = vmatprep.subr.mxu0 0.0
        %356 = vmatpush1.msra.mxu0 0.0
        %357 = vmatprep.subr.mxu0 0.0
        %358 = vmatpush1.msra.mxu0 0.0
        %359 = vmatprep.subr.mxu0 0.0
        %360 = vmatpush1.msra.mxu0 0.0
        %361 = vmatprep.subr.mxu0 0.0
        %362 = vmatpush1.msra.mxu0 0.0
        %363 = vmatprep.subr.mxu0 0.0
        %364 = vmatpush1.msra.mxu0 0.0
        %365 = vmatprep.subr.mxu0 0.0
        %366 = vmatpush1.msra.mxu0 0.0
        %367 = vmatprep.subr.mxu0 0.0
        %368 = vmatpush1.msra.mxu0 0.0
        %369 = vmatprep.subr.mxu0 0.0
        %370 = vmatpush1.msra.mxu0 0.0
        %371 = vmatprep.subr.mxu0 0.0
        %372 = vmatpush1.msra.mxu0 0.0
        %373 = vmatprep.subr.mxu0 0.0
        %374 = vmatpush1.msra.mxu0 0.0
        %375 = vmatprep.subr.mxu0 0.0
        %376 = vmatpush1.msra.mxu0 0.0
        %377 = vmatprep.subr.mxu0 0.0
        %378 = vmatpush1.msra.mxu0 0.0
        %379 = vmatprep.subr.mxu0 0.0
        %380 = vmatpush1.msra.mxu0 0.0
        %381 = vmatprep.subr.mxu0 0.0
        %382 = vmatpush1.msra.mxu0 0.0
        %383 = vmatprep.subr.mxu0 0.0
        %384 = vmatpush1.msra.mxu0 0.0
        %385 = vmatprep.subr.mxu0 0.0
        %386 = vmatpush1.msra.mxu0 0.0
        %387 = vmatprep.subr.mxu0 0.0
        %388 = vmatpush1.msra.mxu0 0.0
        %389 = vmatprep.subr.mxu0 0.0
        %390 = vmatpush1.msra.mxu0 0.0
        %391 = vmatprep.subr.mxu0 0.0
        %392 = vmatpush1.msra.mxu0 0.0
        %393 = vmatprep.subr.mxu0 0.0
        %394 = vmatpush1.msra.mxu0 0.0
        %395 = vmatprep.subr.mxu0 0.0
        %396 = vmatpush1.msra.mxu0 0.0
        %397 = vmatprep.subr.mxu0 0.0
        %398 = vmatpush1.msra.mxu0 0.0
        %399 = vmatprep.subr.mxu0 0.0
        %400 = vmatpush1.msra.mxu0 0.0
        %401 = vmatprep.subr.mxu0 0.0
        %402 = vmatpush1.msra.mxu0 0.0
        %403 = vmatprep.subr.mxu0 0.0
        %404 = vmatpush1.msra.mxu0 0.0
        %405 = vmatprep.subr.mxu0 0.0
        %406 = vmatpush1.msra.mxu0 0.0
        %407 = vmatprep.subr.mxu0 0.0
        %408 = vmatpush1.msra.mxu0 0.0
        %409 = vmatprep.subr.mxu0 0.0
        %410 = vmatpush1.msra.mxu0 0.0
        %411 = vmatprep.mubr.f32.mxu0 0.0
        %412 = vmatmul.mubr.f32.gmra.mrb[0].mxu0 %v345
        %v413 = vpop.f32.mrb[0].mxu0
        %v414 = vadd.f32 0.0, %v413
        %v415 = vpop.f32.mrb[0].mxu0
        %416 = vdwg.mxu0
        %v417 = vadd.f32 %v343, %v414
        %418 = vst.msk [vmem:[#allocation4] sm:$0xff] %vm235, %v417
        %419 = vst.msk [vmem:[#allocation2] sm:$0xff] %vm335, %v317
        // Predicated region
        $region41: #{tpu_custom_call.1} parent=27 // pred_check
          %p420 = pneg %p223
        $region42: #{tpu_custom_call.1} parent=27 // pred_check_branch
          %422 = sbr.rel (%p420) target = $region44
        $region43: #{tpu_custom_call.1} parent=27 // pred_region
          %v423 = vld [vmem:[#allocation3] sm:$0xff]
          %v424 = vrcp.pop %v423
          %v425 = vld [vmem:[#allocation4] sm:$0xff]
          %427 = vset.pattern.permute.xlu0 0
          %428 = vperm.xlu0 %427, %v424
          %v429 = vpop.permute.xlu0 %428
          %v431 = vmul.f32 %v425, %v429
          %432 = vst.msk [vmem:[%s222] sm:$0xff] %vm235, %v431
        $region44: #{tpu_custom_call.1} parent=27 // pred_fallthru
          _
        %s433 = sand.u32 %s107, 1
        %s434 = scalar_lea.sflag [#allocation7], %s433
        %s435 = sand.u32 %s107, 1
        %s436 = smul.addr %s435, 8
        %s437 = scalar_lea.vmem [#allocation10], %s436
        // Predicated region
        $region45: #{tpu_custom_call.1} parent=27 // pred_check
          %p438 = pneg %p117
        $region46: #{tpu_custom_call.1} parent=27 // pred_check_branch
          %440 = sbr.rel (%p438) target = $region48
        $region47: #{tpu_custom_call.1} parent=27 // pred_region
          %s442 = ssub.s32 128, 128
          %443 = vsyncadd %s434, %s442
          %s444 = sadd.s32 %s28, %s27
          %s445 = smul.addr %s444, 128
          %s446 = scalar_lea.hbm %s2, %s445
          %s448 = sshll.u32 %s437, 4
          %s449 = int_to_ptr.vmem [resolvable:$true] %s448
          %451 = dma.vmem_to_hbm [thread:$0]  %s449, 128, %s446, %s434
        $region48: #{tpu_custom_call.1} parent=27 // pred_fallthru
          _
      $region28: #{tpu_custom_call.1} parent=5 // pred_fallthru
        _
      %p452 = scmp.le.s32.totalorder 2, %s17
      // Predicated region
      $region49: #{tpu_custom_call.1} parent=5 // pred_check
        %p453 = pneg %p452
      $region50: #{tpu_custom_call.1} parent=5 // pred_check_branch
        %455 = sbr.rel (%p453) target = $region52
      $region51: #{tpu_custom_call.1} parent=5 // pred_region
        %s456 = ssub.s32 %s17, 2
        // Predicated region
        $region53: #{tpu_custom_call.1} parent=51 // pred_check
          %p457 = pneg %p123
        $region54: #{tpu_custom_call.1} parent=51 // pred_check_branch
          %459 = sbr.rel (%p457) target = $region56
        $region55: #{tpu_custom_call.1} parent=51 // pred_region
          %s460 = sand.u32 %s108, 1
          %s461 = scalar_lea.sflag [#allocation7], %s460
          %s462 = sand.u32 %s108, 1
          %s463 = smul.addr %s462, 8
          %s464 = scalar_lea.vmem [#allocation10], %s463
          %465 = dma.done %s461, 128
        $region56: #{tpu_custom_call.1} parent=51 // pred_fallthru
          _
      $region52: #{tpu_custom_call.1} parent=5 // pred_fallthru
        _
    $region6: #{tpu_custom_call.1} parent=1 // loop_footer
      %s21 = sadd.s32 1, %s17
    $region7: #{tpu_custom_call.1} parent=1 // loop_footer_branch
      %16 = sbr.rel target = $region3
    $region8: #{tpu_custom_call.1} parent=1 // loop_exit
      _
    %466 = vsyncpa [#allocation6], 1
    %s467 = scalar_lea.sflag [#allocation6], 1
    %468 = vsyncpa %s467, 1
    %469 = vsyncpa [#allocation9], 1
    %s470 = scalar_lea.sflag [#allocation9], 1
    %471 = vsyncpa %s470, 1
    %472 = vsyncpa [#allocation7], 1
    %s473 = scalar_lea.sflag [#allocation7], 1
    %474 = vsyncpa %s473, 1

</llo_original>
